<compile_context>
chip_gen: v5e
topology: v5e:2x2
jax: 0.10.0
libtpu: 0.0.40
codegen_flags: <defaults>
</compile_context>

<pallas_src>
import jax
import jax.numpy as jnp
from jax.experimental import pallas as pl
from jax.experimental.pallas import tpu as pltpu

_H1, _H2 = 400, 300          # PyTorch hidden sizes
_H1P, _H2P = 512, 384        # lane-padded hidden sizes (multiples of 128)
_TB_MAX = 512                # max batch tile (MXU M axis)


def _round_up(x, m):
    return (x + m - 1) // m * m


def _critic_kernel(x_ref, w1_ref, b1_ref, w2_ref, b2_ref, w34_ref, b34_ref,
                   out_ref):
    # Cast the fused [state | z] tile to bf16 in-kernel (hidden under the MXU).
    x = x_ref[...].astype(jnp.bfloat16)

    # Extended linear1: (TB, gfv+z) @ (gfv+z, 512) -> (TB, 512), f32 acc.
    # Lanes [0, 400) are the true hidden units; lanes [400, 400+z) carry z via
    # an identity block in w1; remaining lanes are zero.
    pre1 = jnp.dot(x, w1_ref[...],
                   preferred_element_type=jnp.float32) + b1_ref[...]

    # Masked ReLU: only the true hidden lanes are rectified, z lanes pass
    # through.  f32 compare/select on the VPU (v5e-safe), then a single cast so
    # the wide intermediate lives in VMEM as bf16.
    lane = jax.lax.broadcasted_iota(jnp.int32, pre1.shape, 1)
    h1 = jnp.where(lane < _H1, jnp.maximum(pre1, 0.0), pre1).astype(jnp.bfloat16)

    # Combined linear2 over the fused h1||z lanes: (TB, 512) @ (512, 384).
    pre2 = jnp.dot(h1, w2_ref[...],
                   preferred_element_type=jnp.float32) + b2_ref[...]
    h2 = jnp.maximum(pre2, 0.0)

    # Folded linear3+linear4 (single output column): f32 VPU/XLU row reduction.
    out_ref[...] = (jnp.sum(h2 * w34_ref[...], axis=-1, keepdims=True)
                    + b34_ref[...])


@jax.jit
def critic_net_forward(state, z, packed_params):
    """state: (B, gfv_dim) f32, z: (B, z_dim) f32 -> (B, 1) f32."""
    w1e, b1e, w2e, b2e, w34, b34 = packed_params
    B = state.shape[0]
    in_dim = state.shape[1] + z.shape[1]

    # Fuse the two inputs into one (B, gfv+z) operand (replaces the separate
    # z matmul inside the kernel; XLA fuses this with the pad below).
    x = jnp.concatenate([state, z], axis=1)

    # Batch tile: multiple of 8 sublanes, at most _TB_MAX rows, and split into
    # >= 2 tiles when possible so the "parallel" axis shards across both
    # TensorCores on v7x (no effect on single-TC v5e/v6e).
    tb = min(_TB_MAX, max(8, _round_up(-(-B // 2), 8)))
    b_pad = _round_up(B, tb)
    if b_pad != B:
        x = jnp.pad(x, ((0, b_pad - B), (0, 0)))

    grid = (b_pad // tb,)
    batch_map = lambda i: (i, 0)   # tiled along the batch axis
    const_map = lambda i: (0, 0)   # VMEM-resident across all grid steps

    h1p = w1e.shape[1]
    h2p = w2e.shape[1]
    flops = 2 * b_pad * (in_dim * h1p + h1p * h2p + h2p)
    bytes_accessed = (b_pad * (in_dim * 4 + 4)
                      + int(w1e.size) * 2 + int(w2e.size) * 2
                      + (int(b1e.size) + int(b2e.size)
                         + int(w34.size) + int(b34.size)) * 4)
    cost = pl.CostEstimate(flops=flops, transcendentals=0,
                           bytes_accessed=bytes_accessed)

    out = pl.pallas_call(
        _critic_kernel,
        out_shape=jax.ShapeDtypeStruct((b_pad, 1), jnp.float32),
        grid=grid,
        in_specs=[
            pl.BlockSpec((tb, in_dim), batch_map),    # fused [state | z] (f32)
            pl.BlockSpec((in_dim, h1p), const_map),   # extended w1 (bf16)
            pl.BlockSpec((1, h1p), const_map),        # b1 (f32)
            pl.BlockSpec((h1p, h2p), const_map),      # combined w2 (bf16)
            pl.BlockSpec((1, h2p), const_map),        # b2 (f32)
            pl.BlockSpec((1, h2p), const_map),        # folded w3@w4 row (f32)
            pl.BlockSpec((1, 1), const_map),          # folded bias (f32)
        ],
        out_specs=pl.BlockSpec((tb, 1), batch_map),
        compiler_params=pltpu.CompilerParams(
            dimension_semantics=("parallel",)),       # both TCs on v7x
        cost_estimate=cost,
    )(x, w1e, b1e, w2e, b2e, w34, b34)

    return out[:B]


def init_critic_params(key, gfv_dim, z_dim):
    """Raw params mirroring the PyTorch module: xavier-normal weights stored
    transposed as (in, out), zero biases."""
    def xavier(k, fan_in, fan_out):
        std = (2.0 / (fan_in + fan_out)) ** 0.5
        return std * jax.random.normal(k, (fan_in, fan_out), jnp.float32)

    k1, k2, k3, k4 = jax.random.split(key, 4)
    w1 = xavier(k1, gfv_dim, _H1)
    b1 = jnp.zeros((_H1,), jnp.float32)
    w2 = xavier(k2, _H1 + z_dim, _H2)
    b2 = jnp.zeros((_H2,), jnp.float32)
    w3 = xavier(k3, _H2, _H2)
    b3 = jnp.zeros((_H2,), jnp.float32)
    w4 = xavier(k4, _H2, 1)
    b4 = jnp.zeros((1,), jnp.float32)
    return (w1, b1, w2, b2, w3, b3, w4, b4)


def pack_critic_params(raw_params, gfv_dim, z_dim):
    """Wrapper-side preprocessing (exact algebra up to bf16 rounding):
      * fold linear3 into linear4:  w34 = w3 @ w4,  b34 = b3 @ w4 + b4
      * fuse z into linear1's padded lanes via an identity block, and place the
        z-rows of linear2's weight into the matching rows of the combined w2
      * zero-pad hidden dims 400+z -> 512 and 300 -> 384 (lane multiples)
      * cast MXU weights to bf16 (biases and the folded final row stay f32)

    NOTE: the w3@w4 fold is only valid for inference-style forwards (gradients
    w.r.t. w3/w4 are not separable through the fused weight)."""
    w1, b1, w2, b2, w3, b3, w4, b4 = raw_params
    in_dim = gfv_dim + z_dim
    assert _H1 + z_dim <= _H1P, "z_dim too large to fuse into the padded lanes"

    # Fold: (h2 @ w3 + b3) @ w4 + b4 == h2 @ (w3 @ w4) + (b3 @ w4 + b4).
    w34 = w3 @ w4                       # (300, 1)
    b34 = b3 @ w4 + b4                  # (1,)

    # Extended linear1: state -> lanes [0,400); z -> lanes [400,400+z) via eye.
    w1e = jnp.zeros((in_dim, _H1P), jnp.float32)
    w1e = w1e.at[:gfv_dim, :_H1].set(w1)
    w1e = w1e.at[gfv_dim:, _H1:_H1 + z_dim].set(jnp.eye(z_dim, dtype=jnp.float32))
    b1e = jnp.pad(b1, (0, _H1P - _H1)).reshape(1, _H1P)   # zero on z/pad lanes

    # Combined linear2 over the fused h1||z lanes.
    w2e = jnp.zeros((_H1P, _H2P), jnp.float32)
    w2e = w2e.at[:_H1, :_H2].set(w2[:_H1, :])              # h1 part
    w2e = w2e.at[_H1:_H1 + z_dim, :_H2].set(w2[_H1:, :])   # z part
    b2e = jnp.pad(b2, (0, _H2P - _H2)).reshape(1, _H2P)

    w34p = jnp.pad(w34[:, 0], (0, _H2P - _H2)).reshape(1, _H2P)
    b34p = b34.reshape(1, 1)

    return (w1e.astype(jnp.bfloat16),
            b1e,
            w2e.astype(jnp.bfloat16),
            b2e,
            w34p,                      # f32: used on the VPU, not the MXU
            b34p)


def _reference_exact(state, z, raw_params):
    """Pure-f32 JAX reference mirroring the PyTorch module exactly."""
    w1, b1, w2, b2, w3, b3, w4, b4 = raw_params
    out = jax.nn.relu(state @ w1 + b1)
    out = jax.nn.relu(jnp.concatenate([out, z], axis=1) @ w2 + b2)
    out = out @ w3 + b3
    out = out @ w4 + b4
    return out


def _reference_packed(state, z, packed_params):
    """Same numerics as the kernel (bf16 MXU operands, fused/folded/padded
    weights): validates the Pallas plumbing independently of bf16 error."""
    w1e, b1e, w2e, b2e, w34, b34 = packed_params
    x = jnp.concatenate([state, z], axis=1).astype(jnp.bfloat16)
    pre1 = jnp.dot(x, w1e, preferred_element_type=jnp.float32) + b1e
    lane = jnp.arange(pre1.shape[1])[None, :]
    h1 = jnp.where(lane < _H1, jnp.maximum(pre1, 0.0), pre1).astype(jnp.bfloat16)
    h2 = jnp.maximum(jnp.dot(h1, w2e, preferred_element_type=jnp.float32) + b2e,
                     0.0)
    return jnp.sum(h2 * w34, axis=-1, keepdims=True) + b34


if __name__ == "__main__":
    gfv_dim, z_dim, batch = 32, 8, 2

    key = jax.random.PRNGKey(0)
    k_state, k_z, k_params = jax.random.split(key, 3)

    state = jax.random.normal(k_state, (batch, gfv_dim), jnp.float32)
    z = jax.random.normal(k_z, (batch, z_dim), jnp.float32)

    raw_params = init_critic_params(k_params, gfv_dim, z_dim)
    packed_params = pack_critic_params(raw_params, gfv_dim, z_dim)

    out = critic_net_forward(state, z, packed_params)
    out = jax.block_until_ready(out)
    assert out.shape == (batch, 1)

    # Tight check vs. a JAX reference with identical numerics (bf16 dots,
    # fused/folded/padded weights): validates grid/BlockSpec/kernel math.
    ref_packed = _reference_packed(state, z, packed_params)
    assert jnp.allclose(out, ref_packed, atol=1e-4, rtol=1e-4), (out, ref_packed)

    # Fidelity check vs. exact f32 PyTorch semantics (bf16 quantization and the
    # w3@w4 fold perturb rounding slightly).
    ref_exact = _reference_exact(state, z, raw_params)
    assert jnp.allclose(out, ref_exact, atol=5e-2, rtol=5e-2), (out, ref_exact)

    print("KERNEL_OK")
</pallas_src>

<mosaic_0001>
module attributes {stable_mosaic.version = 11 : i64} {
  func.func @_critic_kernel(%arg0: i32, %arg1: memref<8x40xf32, #tpu.memory_space<vmem>>, %arg2: memref<40x512xbf16, #tpu.memory_space<vmem>>, %arg3: memref<1x512xf32, #tpu.memory_space<vmem>>, %arg4: memref<512x384xbf16, #tpu.memory_space<vmem>>, %arg5: memref<1x384xf32, #tpu.memory_space<vmem>>, %arg6: memref<1x384xf32, #tpu.memory_space<vmem>>, %arg7: memref<1x1xf32, #tpu.memory_space<vmem>>, %arg8: memref<8x1xf32, #tpu.memory_space<vmem>>) attributes {dimension_semantics = [#tpu.dimension_semantics<parallel>], iteration_bounds = array<i64: 1>, scalar_prefetch = 0 : i64, scratch_operands = 0 : i64, tpu.core_type = #tpu.core_type<tc>, window_params = [{transform_indices = @transform_0, window_bounds = array<i64: 8, 40>}, {pipeline_mode = #tpu.pipeline_mode<synchronous>, transform_indices = @transform_1, window_bounds = array<i64: 40, 512>}, {pipeline_mode = #tpu.pipeline_mode<synchronous>, transform_indices = @transform_2, window_bounds = array<i64: 1, 512>}, {pipeline_mode = #tpu.pipeline_mode<synchronous>, transform_indices = @transform_3, window_bounds = array<i64: 512, 384>}, {pipeline_mode = #tpu.pipeline_mode<synchronous>, transform_indices = @transform_4, window_bounds = array<i64: 1, 384>}, {pipeline_mode = #tpu.pipeline_mode<synchronous>, transform_indices = @transform_5, window_bounds = array<i64: 1, 384>}, {pipeline_mode = #tpu.pipeline_mode<synchronous>, transform_indices = @transform_6, window_bounds = array<i64: 1, 1>}, {transform_indices = @transform_7, window_bounds = array<i64: 8, 1>}]} {
    %c0 = arith.constant 0 : index
    %c0_0 = arith.constant 0 : index
    %0 = vector.load %arg1[%c0, %c0_0] : memref<8x40xf32, #tpu.memory_space<vmem>>, vector<8x40xf32>
    %1 = arith.truncf %0 : vector<8x40xf32> to vector<8x40xbf16>
    %c0_1 = arith.constant 0 : index
    %c0_2 = arith.constant 0 : index
    %2 = vector.load %arg2[%c0_1, %c0_2] : memref<40x512xbf16, #tpu.memory_space<vmem>>, vector<40x512xbf16>
    %cst = arith.constant dense<0.000000e+00> : vector<8x512xf32>
    %3 = tpu.matmul %1, %2, %cst {dimension_numbers = #tpu.dot_dimension_numbers<[1], [0], [0], [1], [0, 0, 1, 1], [], []>} : vector<8x40xbf16>, vector<40x512xbf16>, vector<8x512xf32> -> vector<8x512xf32>
    %c0_3 = arith.constant 0 : index
    %c0_4 = arith.constant 0 : index
    %4 = vector.load %arg3[%c0_3, %c0_4] : memref<1x512xf32, #tpu.memory_space<vmem>>, vector<1x512xf32>
    %5 = vector.broadcast %4 : vector<1x512xf32> to vector<8x512xf32>
    %6 = arith.addf %3, %5 : vector<8x512xf32>
    %7 = tpu.iota {dimensions = array<i32: 1>} : vector<8x512xi32>
    %c400_i32 = arith.constant 400 : i32
    %8 = vector.broadcast %c400_i32 : i32 to vector<8x512xi32>
    %9 = arith.cmpi slt, %7, %8 : vector<8x512xi32>
    %cst_5 = arith.constant 0.000000e+00 : f32
    %10 = vector.broadcast %cst_5 : f32 to vector<8x512xf32>
    %11 = arith.maximumf %6, %10 : vector<8x512xf32>
    %12 = arith.select %9, %11, %6 : vector<8x512xi1>, vector<8x512xf32>
    %13 = arith.truncf %12 : vector<8x512xf32> to vector<8x512xbf16>
    %c0_6 = arith.constant 0 : index
    %c0_7 = arith.constant 0 : index
    %14 = vector.load %arg4[%c0_6, %c0_7] : memref<512x384xbf16, #tpu.memory_space<vmem>>, vector<512x384xbf16>
    %cst_8 = arith.constant dense<0.000000e+00> : vector<8x384xf32>
    %15 = tpu.matmul %13, %14, %cst_8 {dimension_numbers = #tpu.dot_dimension_numbers<[1], [0], [0], [1], [0, 0, 1, 1], [], []>} : vector<8x512xbf16>, vector<512x384xbf16>, vector<8x384xf32> -> vector<8x384xf32>
    %c0_9 = arith.constant 0 : index
    %c0_10 = arith.constant 0 : index
    %16 = vector.load %arg5[%c0_9, %c0_10] : memref<1x384xf32, #tpu.memory_space<vmem>>, vector<1x384xf32>
    %17 = vector.broadcast %16 : vector<1x384xf32> to vector<8x384xf32>
    %18 = arith.addf %15, %17 : vector<8x384xf32>
    %cst_11 = arith.constant 0.000000e+00 : f32
    %19 = vector.broadcast %cst_11 : f32 to vector<8x384xf32>
    %20 = arith.maximumf %18, %19 : vector<8x384xf32>
    %c0_12 = arith.constant 0 : index
    %c0_13 = arith.constant 0 : index
    %21 = vector.load %arg6[%c0_12, %c0_13] : memref<1x384xf32, #tpu.memory_space<vmem>>, vector<1x384xf32>
    %22 = vector.broadcast %21 : vector<1x384xf32> to vector<8x384xf32>
    %23 = arith.mulf %20, %22 : vector<8x384xf32>
    %cst_14 = arith.constant dense<0.000000e+00> : vector<8xf32>
    %24 = vector.multi_reduction <add>, %23, %cst_14 [1] : vector<8x384xf32> to vector<8xf32>
    %25 = vector.shape_cast %24 : vector<8xf32> to vector<8x1xf32>
    %c0_15 = arith.constant 0 : index
    %c0_16 = arith.constant 0 : index
    %26 = vector.load %arg7[%c0_15, %c0_16] : memref<1x1xf32, #tpu.memory_space<vmem>>, vector<1x1xf32>
    %27 = vector.broadcast %26 : vector<1x1xf32> to vector<8x1xf32>
    %28 = arith.addf %25, %27 : vector<8x1xf32>
    %c0_17 = arith.constant 0 : index
    %c0_18 = arith.constant 0 : index
    %29 = vector.load %arg8[%c0_17, %c0_18] : memref<8x1xf32, #tpu.memory_space<vmem>>, vector<8x1xf32>
    tpu.vector_store %arg8[%c0_17, %c0_18], %28 {strides = array<i32>} : memref<8x1xf32, #tpu.memory_space<vmem>>, vector<8x1xf32>,
    return
  }
  func.func @transform_0(%arg0: i32) -> (i32, i32) {
    %c0_i32 = arith.constant 0 : i32
    %c0_i32_0 = arith.constant 0 : i32
    return %arg0, %c0_i32 : i32, i32
  }
  func.func @transform_1(%arg0: i32) -> (i32, i32) {
    %c0_i32 = arith.constant 0 : i32
    %c0_i32_0 = arith.constant 0 : i32
    %c0_i32_1 = arith.constant 0 : i32
    return %c0_i32, %c0_i32_0 : i32, i32
  }
  func.func @transform_2(%arg0: i32) -> (i32, i32) {
    %c0_i32 = arith.constant 0 : i32
    %c0_i32_0 = arith.constant 0 : i32
    %c0_i32_1 = arith.constant 0 : i32
    return %c0_i32, %c0_i32_0 : i32, i32
  }
  func.func @transform_3(%arg0: i32) -> (i32, i32) {
    %c0_i32 = arith.constant 0 : i32
    %c0_i32_0 = arith.constant 0 : i32
    %c0_i32_1 = arith.constant 0 : i32
    return %c0_i32, %c0_i32_0 : i32, i32
  }
  func.func @transform_4(%arg0: i32) -> (i32, i32) {
    %c0_i32 = arith.constant 0 : i32
    %c0_i32_0 = arith.constant 0 : i32
    %c0_i32_1 = arith.constant 0 : i32
    return %c0_i32, %c0_i32_0 : i32, i32
  }
  func.func @transform_5(%arg0: i32) -> (i32, i32) {
    %c0_i32 = arith.constant 0 : i32
    %c0_i32_0 = arith.constant 0 : i32
    %c0_i32_1 = arith.constant 0 : i32
    return %c0_i32, %c0_i32_0 : i32, i32
  }
  func.func @transform_6(%arg0: i32) -> (i32, i32) {
    %c0_i32 = arith.constant 0 : i32
    %c0_i32_0 = arith.constant 0 : i32
    %c0_i32_1 = arith.constant 0 : i32
    return %c0_i32, %c0_i32_0 : i32, i32
  }
  func.func @transform_7(%arg0: i32) -> (i32, i32) {
    %c0_i32 = arith.constant 0 : i32
    %c0_i32_0 = arith.constant 0 : i32
    return %arg0, %c0_i32 : i32, i32
  }
}

</mosaic_0001>

<llo_original>
// kernel: critic_net_forward.1
$region0: #{critic_net_forward.1}
  #allocation0 [shape = 'u32[]', space=smem, size = 0x4, offset = 0x4, fixed_abs, tag = 'smem constant byte address 0x4 - core index']
  #allocation1 [shape = 'u32[72,128]{1,0:T(1,128)}', space=vmem, size = 0x9000, scoped, tag = 'internal scratch']
  #allocation2 [shape = 'f32[1,1]{1,0:T(1,128)S(1)}', space=vmem, size = 0x200, scoped, tag = 'scoped memory for critic_net_forward.1']
  %s0 = inlined_call_operand.vmem [shape: f32[8,40], index: 0, kind: input, shape index: {}]
  %s1 = inlined_call_operand.hbm [shape: bf16[40,512], index: 1, kind: input, shape index: {}]
  %s2 = inlined_call_operand.vmem [shape: f32[1,512], index: 2, kind: input, shape index: {}]
  %s3 = inlined_call_operand.hbm [shape: bf16[512,384], index: 3, kind: input, shape index: {}]
  %s4 = inlined_call_operand.vmem [shape: f32[1,384], index: 4, kind: input, shape index: {}]
  %s5 = inlined_call_operand.vmem [shape: f32[1,384], index: 5, kind: input, shape index: {}]
  %s6 = inlined_call_operand.<no memory space> [shape: f32[1,1], index: 6, kind: input, shape index: {}]
  %s7 = inlined_call_operand.vmem [shape: f32[8,1], index: 7, kind: output, shape index: {}]
  %s8 = sld [smem:[#allocation0]]
  $region46: #{critic_net_forward.1} parent=0
    _
  %s10 = ssub.s32 1, %s8
  %s11 = scalar_select 0, %s10, %s8
  %v12 = vstv %s6
  %13 = vst [vmem:[#allocation2] sm:$0x1] %v12
  $region1: #{critic_net_forward.1} parent=0
    #allocation3 [shape = 'u8[40960]{0}', space=vmem, size = 0xa000, scoped, tag = 'input window, operand 1, single buffered']
    #allocation4 [shape = 's32[1]{0}', space=sflag, size = 0x4, scoped, tag = 'scoped memory for critic_net_forward.1']
    #allocation5 [shape = 'u8[393216]{0}', space=vmem, size = 0x60000, scoped, tag = 'input window, operand 3, single buffered']
    #allocation6 [shape = 's32[1]{0}', space=sflag, size = 0x4, scoped, tag = 'scoped memory for critic_net_forward.1']
    %14 = vsyncpa [#allocation4], 0
    %15 = vsyncpa [#allocation6], 0
    // Predicated region
    $region2: #{critic_net_forward.1} parent=1 // pred_check
      _
    $region3: #{critic_net_forward.1} parent=1 // pred_check_branch
      %17 = sbr.rel (0) target = $region5
    $region4: #{critic_net_forward.1} parent=1 // pred_region
      _
    $region5: #{critic_net_forward.1} parent=1 // pred_fallthru
      _
    // Predicated region
    $region6: #{critic_net_forward.1} parent=1 // pred_check
      _
    $region7: #{critic_net_forward.1} parent=1 // pred_check_branch
      %19 = sbr.rel (0) target = $region9
    $region8: #{critic_net_forward.1} parent=1 // pred_region
      %21 = vsyncadd [#allocation4], 0
      %s22 = sshll.u32 %s1, 4
      %s23 = int_to_ptr.hbm [resolvable:$true] %s22
      %s24 = sshll.u32 [#allocation3], 4
      %s25 = int_to_ptr.vmem [resolvable:$true] %s24
      %30 = dma.hbm_to_vmem [thread:$0]  %s23, 1280, %s25, [#allocation4], 256, 256, 16
    $region9: #{critic_net_forward.1} parent=1 // pred_fallthru
      _
    // Predicated region
    $region10: #{critic_net_forward.1} parent=1 // pred_check
      _
    $region11: #{critic_net_forward.1} parent=1 // pred_check_branch
      %32 = sbr.rel (0) target = $region13
    $region12: #{critic_net_forward.1} parent=1 // pred_region
      _
    $region13: #{critic_net_forward.1} parent=1 // pred_fallthru
      _
    // Predicated region
    $region14: #{critic_net_forward.1} parent=1 // pred_check
      _
    $region15: #{critic_net_forward.1} parent=1 // pred_check_branch
      %34 = sbr.rel (0) target = $region17
    $region16: #{critic_net_forward.1} parent=1 // pred_region
      %36 = vsyncadd [#allocation6], 0
      %s37 = sshll.u32 %s3, 4
      %s38 = int_to_ptr.hbm [resolvable:$true] %s37
      %s39 = sshll.u32 [#allocation5], 4
      %s40 = int_to_ptr.vmem [resolvable:$true] %s39
      %45 = dma.hbm_to_vmem [thread:$0]  %s38, 12288, %s40, [#allocation6], 192, 192, 12
    $region17: #{critic_net_forward.1} parent=1 // pred_fallthru
      _
    // Predicated region
    $region18: #{critic_net_forward.1} parent=1 // pred_check
      _
    $region19: #{critic_net_forward.1} parent=1 // pred_check_branch
      %47 = sbr.rel (0) target = $region21
    $region20: #{critic_net_forward.1} parent=1 // pred_region
      _
    $region21: #{critic_net_forward.1} parent=1 // pred_fallthru
      _
    // Predicated region
    $region22: #{critic_net_forward.1} parent=1 // pred_check
      _
    $region23: #{critic_net_forward.1} parent=1 // pred_check_branch
      %49 = sbr.rel (0) target = $region25
    $region24: #{critic_net_forward.1} parent=1 // pred_region
      _
    $region25: #{critic_net_forward.1} parent=1 // pred_fallthru
      _
    // Predicated region
    $region26: #{critic_net_forward.1} parent=1 // pred_check
      _
    $region27: #{critic_net_forward.1} parent=1 // pred_check_branch
      %51 = sbr.rel (0) target = $region29
    $region28: #{critic_net_forward.1} parent=1 // pred_region
      _
    $region29: #{critic_net_forward.1} parent=1 // pred_fallthru
      _
    // Predicated region
    $region30: #{critic_net_forward.1} parent=1 // pred_check
      _
    $region31: #{critic_net_forward.1} parent=1 // pred_check_branch
      %53 = sbr.rel (0) target = $region33
    $region32: #{critic_net_forward.1} parent=1 // pred_region
      %55 = dma.done [#allocation4], 1280
    $region33: #{critic_net_forward.1} parent=1 // pred_fallthru
      _
    // Predicated region
    $region34: #{critic_net_forward.1} parent=1 // pred_check
      _
    $region35: #{critic_net_forward.1} parent=1 // pred_check_branch
      %57 = sbr.rel (0) target = $region37
    $region36: #{critic_net_forward.1} parent=1 // pred_region
      %59 = dma.done [#allocation6], 12288
    $region37: #{critic_net_forward.1} parent=1 // pred_fallthru
      _
    %v61 = vld [vmem:[%s0] sm:$0xff]
    %v62 = vpack.c.bf16 %v61, %v61
    %v63 = vld [vmem:[#allocation3] sm:$0xff]
    %v64 = vld [vmem:[#allocation3 + $0x8] sm:$0xff]
    %v65 = vld [vmem:[#allocation3 + $0x10] sm:$0xff]
    %v66 = vld [vmem:[#allocation3 + $0x18] sm:$0xff]
    %v67 = vld [vmem:[#allocation3 + $0x20] sm:$0xff]
    %v68 = vld [vmem:[#allocation3 + $0x28] sm:$0xff]
    %v69 = vld [vmem:[#allocation3 + $0x30] sm:$0xff]
    %v70 = vld [vmem:[#allocation3 + $0x38] sm:$0xff]
    %v71 = vld [vmem:[#allocation3 + $0x40] sm:$0xff]
    %v72 = vld [vmem:[#allocation3 + $0x48] sm:$0xff]
    %v73 = vld [vmem:[%s2] sm:$0xf]
    %v75 = vperm.slane %v73, 0
    %v76 = vperm.slane %v73, 1
    %v77 = vperm.slane %v73, 2
    %v78 = vperm.slane %v73, 3
    %v93 = vunpack.c.l.b16 %v63
    %v94 = vunpack.c.h.b16 %v63
    %v95 = vunpack.c.l.b16 %v64
    %v96 = vunpack.c.h.b16 %v64
    %v97 = vunpack.c.l.b16 %v65
    %v98 = vunpack.c.h.b16 %v65
    %v99 = vunpack.c.l.b16 %v66
    %v100 = vunpack.c.h.b16 %v66
    %v101 = vunpack.c.l.b16 %v67
    %v102 = vunpack.c.h.b16 %v67
    %v103 = vunpack.c.l.b16 %v68
    %v104 = vunpack.c.h.b16 %v68
    %v105 = vunpack.c.l.b16 %v69
    %v106 = vunpack.c.h.b16 %v69
    %v107 = vunpack.c.l.b16 %v70
    %v108 = vunpack.c.h.b16 %v70
    %v109 = vunpack.c.l.b16 %v71
    %v110 = vunpack.c.h.b16 %v71
    %v111 = vunpack.c.l.b16 %v72
    %v112 = vunpack.c.h.b16 %v72
    %v113 = vpack.c.b16 %v97, %v93
    %v114 = vpack.c.b16 %v98, %v94
    %v115 = vpack.c.b16 %v99, %v95
    %v116 = vpack.c.b16 %v100, %v96
    %v117 = vpack.c.b16 %v105, %v101
    %v118 = vpack.c.b16 %v106, %v102
    %v119 = vpack.c.b16 %v107, %v103
    %v120 = vpack.c.b16 %v108, %v104
    %v121 = vpack.c.b16 %v109, %v109
    %v122 = vpack.c.b16 %v110, %v110
    %v123 = vpack.c.b16 %v111, %v111
    %v124 = vpack.c.b16 %v112, %v112
    %vm133 = vcmask 326656
    %v135 = vsel %vm133, %v62, 0
    %vm137 = vcmask 1043456
    %v139 = vsel %vm137, %v121, 0
    %v142 = vsel %vm137, %v122, 0
    %v145 = vsel %vm137, %v123, 0
    %v148 = vsel %vm137, %v124, 0
    %150 = vmatpush.bf16.msra.mxu0 0
    %151 = vmatpush.bf16.msra.mxu0 0
    %152 = vmatpush.bf16.msra.mxu0 0
    %153 = vmatpush.bf16.msra.mxu0 0
    %154 = vmatpush.bf16.msra.mxu0 0
    %155 = vmatpush.bf16.msra.mxu0 %v139
    %156 = vmatpush.bf16.msra.mxu0 %v117
    %157 = vmatpush.bf16.msra.mxu0 %v113
    %158 = vmatmul.bf16.gmra.mxu0 %v135
    %v159 = vpop.f32.mrf.mxu0
    %v160 = vadd.f32 %v75, %v159
    %v161 = vpop.f32.mrf.mxu0
    %162 = vdwg.mxu0
    %163 = vmatpush.bf16.msra.mxu0 0
    %164 = vmatpush.bf16.msra.mxu0 0
    %165 = vmatpush.bf16.msra.mxu0 0
    %166 = vmatpush.bf16.msra.mxu0 0
    %167 = vmatpush.bf16.msra.mxu0 0
    %168 = vmatpush.bf16.msra.mxu0 %v142
    %169 = vmatpush.bf16.msra.mxu0 %v118
    %170 = vmatpush.bf16.msra.mxu0 %v114
    %171 = vmatmul.bf16.gmra.mxu0 %v135
    %v172 = vpop.f32.mrf.mxu0
    %v173 = vadd.f32 %v76, %v172
    %v174 = vpop.f32.mrf.mxu0
    %175 = vdwg.mxu0
    %176 = vmatpush.bf16.msra.mxu0 0
    %177 = vmatpush.bf16.msra.mxu0 0
    %178 = vmatpush.bf16.msra.mxu0 0
    %179 = vmatpush.bf16.msra.mxu0 0
    %180 = vmatpush.bf16.msra.mxu0 0
    %181 = vmatpush.bf16.msra.mxu0 %v145
    %182 = vmatpush.bf16.msra.mxu0 %v119
    %183 = vmatpush.bf16.msra.mxu0 %v115
    %184 = vmatmul.bf16.gmra.mxu0 %v135
    %v185 = vpop.f32.mrf.mxu0
    %v186 = vadd.f32 %v77, %v185
    %v187 = vpop.f32.mrf.mxu0
    %188 = vdwg.mxu0
    %189 = vmatpush.bf16.msra.mxu0 0
    %190 = vmatpush.bf16.msra.mxu0 0
    %191 = vmatpush.bf16.msra.mxu0 0
    %192 = vmatpush.bf16.msra.mxu0 0
    %193 = vmatpush.bf16.msra.mxu0 0
    %194 = vmatpush.bf16.msra.mxu0 %v148
    %195 = vmatpush.bf16.msra.mxu0 %v120
    %196 = vmatpush.bf16.msra.mxu0 %v116
    %197 = vmatmul.bf16.gmra.mxu0 %v135
    %v198 = vpop.f32.mrf.mxu0
    %v199 = vadd.f32 %v78, %v198
    %v200 = vpop.f32.mrf.mxu0
    %201 = vdwg.mxu0
    %v202 = vlaneseq
    %v203 = vand.u32 %v202, 127
    %v204 = vadd.s32 %v203, 128
    %v205 = vadd.s32 %v203, 256
    %v206 = vadd.s32 %v203, 384
    %vm207 = vcmp.lt.s32.totalorder %v203, 400
    %vm208 = vcmp.lt.s32.totalorder %v204, 400
    %vm209 = vcmp.lt.s32.totalorder %v205, 400
    %vm210 = vcmp.lt.s32.totalorder %v206, 400
    %v211 = vmax.f32 %v160, 0.0
    %v212 = vmax.f32 %v173, 0.0
    %v213 = vmax.f32 %v186, 0.0
    %v214 = vmax.f32 %v199, 0.0
    %v215 = vsel %vm207, %v211, %v160
    %v216 = vsel %vm208, %v212, %v173
    %v217 = vsel %vm209, %v213, %v186
    %v218 = vsel %vm210, %v214, %v199
    %v219 = vpack.c.bf16 %v215, %v215
    %v220 = vpack.c.bf16 %v216, %v216
    %v221 = vpack.c.bf16 %v217, %v217
    %v222 = vpack.c.bf16 %v218, %v218
    %v223 = vld [vmem:[#allocation5] sm:$0xff]
    %v224 = vld [vmem:[#allocation5 + $0x8] sm:$0xf]
    %v225 = vld [vmem:[#allocation5 + $0xc] sm:$0xff]
    %v226 = vld [vmem:[#allocation5 + $0x14] sm:$0xf]
    %v227 = vld [vmem:[#allocation5 + $0x18] sm:$0xff]
    %v228 = vld [vmem:[#allocation5 + $0x20] sm:$0xf]
    %v229 = vld [vmem:[#allocation5 + $0x24] sm:$0xff]
    %v230 = vld [vmem:[#allocation5 + $0x2c] sm:$0xf]
    %v231 = vld [vmem:[#allocation5 + $0x30] sm:$0xff]
    %v232 = vld [vmem:[#allocation5 + $0x38] sm:$0xf]
    %v233 = vld [vmem:[#allocation5 + $0x3c] sm:$0xff]
    %v234 = vld [vmem:[#allocation5 + $0x44] sm:$0xf]
    %v235 = vld [vmem:[#allocation5 + $0x48] sm:$0xff]
    %v236 = vld [vmem:[#allocation5 + $0x50] sm:$0xf]
    %v237 = vld [vmem:[#allocation5 + $0x54] sm:$0xff]
    %v238 = vld [vmem:[#allocation5 + $0x5c] sm:$0xf]
    %v239 = vld [vmem:[#allocation5 + $0x60] sm:$0xff]
    %v240 = vld [vmem:[#allocation5 + $0x68] sm:$0xf]
    %v241 = vld [vmem:[#allocation5 + $0x6c] sm:$0xff]
    %v242 = vld [vmem:[#allocation5 + $0x74] sm:$0xf]
    %v243 = vld [vmem:[#allocation5 + $0x78] sm:$0xff]
    %v244 = vld [vmem:[#allocation5 + $0x80] sm:$0xf]
    %v245 = vld [vmem:[#allocation5 + $0x84] sm:$0xff]
    %v246 = vld [vmem:[#allocation5 + $0x8c] sm:$0xf]
    %v247 = vld [vmem:[#allocation5 + $0x90] sm:$0xff]
    %v248 = vld [vmem:[#allocation5 + $0x98] sm:$0xf]
    %v249 = vld [vmem:[#allocation5 + $0x9c] sm:$0xff]
    %v250 = vld [vmem:[#allocation5 + $0xa4] sm:$0xf]
    %v251 = vld [vmem:[#allocation5 + $0xa8] sm:$0xff]
    %v252 = vld [vmem:[#allocation5 + $0xb0] sm:$0xf]
    %v253 = vld [vmem:[#allocation5 + $0xb4] sm:$0xff]
    %v254 = vld [vmem:[#allocation5 + $0xbc] sm:$0xf]
    %v255 = vld [vmem:[#allocation5 + $0xc0] sm:$0xff]
    %v256 = vld [vmem:[#allocation5 + $0xc8] sm:$0xf]
    %v257 = vld [vmem:[#allocation5 + $0xcc] sm:$0xff]
    %v258 = vld [vmem:[#allocation5 + $0xd4] sm:$0xf]
    %v259 = vld [vmem:[#allocation5 + $0xd8] sm:$0xff]
    %v260 = vld [vmem:[#allocation5 + $0xe0] sm:$0xf]
    %v261 = vld [vmem:[#allocation5 + $0xe4] sm:$0xff]
    %v262 = vld [vmem:[#allocation5 + $0xec] sm:$0xf]
    %v263 = vld [vmem:[#allocation5 + $0xf0] sm:$0xff]
    %v264 = vld [vmem:[#allocation5 + $0xf8] sm:$0xf]
    %v265 = vld [vmem:[#allocation5 + $0xfc] sm:$0xff]
    %v266 = vld [vmem:[#allocation5 + $0x104] sm:$0xf]
    %v267 = vld [vmem:[#allocation5 + $0x108] sm:$0xff]
    %v268 = vld [vmem:[#allocation5 + $0x110] sm:$0xf]
    %v269 = vld [vmem:[#allocation5 + $0x114] sm:$0xff]
    %v270 = vld [vmem:[#allocation5 + $0x11c] sm:$0xf]
    %v271 = vld [vmem:[#allocation5 + $0x120] sm:$0xff]
    %v272 = vld [vmem:[#allocation5 + $0x128] sm:$0xf]
    %v273 = vld [vmem:[#allocation5 + $0x12c] sm:$0xff]
    %v274 = vld [vmem:[#allocation5 + $0x134] sm:$0xf]
    %v275 = vld [vmem:[#allocation5 + $0x138] sm:$0xff]
    %v276 = vld [vmem:[#allocation5 + $0x140] sm:$0xf]
    %v277 = vld [vmem:[#allocation5 + $0x144] sm:$0xff]
    %v278 = vld [vmem:[#allocation5 + $0x14c] sm:$0xf]
    %v279 = vld [vmem:[#allocation5 + $0x150] sm:$0xff]
    %v280 = vld [vmem:[#allocation5 + $0x158] sm:$0xf]
    %v281 = vld [vmem:[#allocation5 + $0x15c] sm:$0xff]
    %v282 = vld [vmem:[#allocation5 + $0x164] sm:$0xf]
    %v283 = vld [vmem:[#allocation5 + $0x168] sm:$0xff]
    %v284 = vld [vmem:[#allocation5 + $0x170] sm:$0xf]
    %v285 = vld [vmem:[#allocation5 + $0x174] sm:$0xff]
    %v286 = vld [vmem:[#allocation5 + $0x17c] sm:$0xf]
    %v287 = vld [vmem:[#allocation5 + $0x180] sm:$0xff]
    %v288 = vld [vmem:[#allocation5 + $0x188] sm:$0xf]
    %v289 = vld [vmem:[#allocation5 + $0x18c] sm:$0xff]
    %v290 = vld [vmem:[#allocation5 + $0x194] sm:$0xf]
    %v291 = vld [vmem:[#allocation5 + $0x198] sm:$0xff]
    %v292 = vld [vmem:[#allocation5 + $0x1a0] sm:$0xf]
    %v293 = vld [vmem:[#allocation5 + $0x1a4] sm:$0xff]
    %v294 = vld [vmem:[#allocation5 + $0x1ac] sm:$0xf]
    %v295 = vld [vmem:[#allocation5 + $0x1b0] sm:$0xff]
    %v296 = vld [vmem:[#allocation5 + $0x1b8] sm:$0xf]
    %v297 = vld [vmem:[#allocation5 + $0x1bc] sm:$0xff]
    %v298 = vld [vmem:[#allocation5 + $0x1c4] sm:$0xf]
    %v299 = vld [vmem:[#allocation5 + $0x1c8] sm:$0xff]
    %v300 = vld [vmem:[#allocation5 + $0x1d0] sm:$0xf]
    %v301 = vld [vmem:[#allocation5 + $0x1d4] sm:$0xff]
    %v302 = vld [vmem:[#allocation5 + $0x1dc] sm:$0xf]
    %v303 = vld [vmem:[#allocation5 + $0x1e0] sm:$0xff]
    %v304 = vld [vmem:[#allocation5 + $0x1e8] sm:$0xf]
    %v305 = vld [vmem:[#allocation5 + $0x1ec] sm:$0xff]
    %v306 = vld [vmem:[#allocation5 + $0x1f4] sm:$0xf]
    %v307 = vld [vmem:[#allocation5 + $0x1f8] sm:$0xff]
    %v308 = vld [vmem:[#allocation5 + $0x200] sm:$0xf]
    %v309 = vld [vmem:[#allocation5 + $0x204] sm:$0xff]
    %v310 = vld [vmem:[#allocation5 + $0x20c] sm:$0xf]
    %v311 = vld [vmem:[#allocation5 + $0x210] sm:$0xff]
    %v312 = vld [vmem:[#allocation5 + $0x218] sm:$0xf]
    %v313 = vld [vmem:[#allocation5 + $0x21c] sm:$0xff]
    %v314 = vld [vmem:[#allocation5 + $0x224] sm:$0xf]
    %v315 = vld [vmem:[#allocation5 + $0x228] sm:$0xff]
    %v316 = vld [vmem:[#allocation5 + $0x230] sm:$0xf]
    %v317 = vld [vmem:[#allocation5 + $0x234] sm:$0xff]
    %v318 = vld [vmem:[#allocation5 + $0x23c] sm:$0xf]
    %v319 = vld [vmem:[#allocation5 + $0x240] sm:$0xff]
    %v320 = vld [vmem:[#allocation5 + $0x248] sm:$0xf]
    %v321 = vld [vmem:[#allocation5 + $0x24c] sm:$0xff]
    %v322 = vld [vmem:[#allocation5 + $0x254] sm:$0xf]
    %v323 = vld [vmem:[#allocation5 + $0x258] sm:$0xff]
    %v324 = vld [vmem:[#allocation5 + $0x260] sm:$0xf]
    %v325 = vld [vmem:[#allocation5 + $0x264] sm:$0xff]
    %v326 = vld [vmem:[#allocation5 + $0x26c] sm:$0xf]
    %v327 = vld [vmem:[#allocation5 + $0x270] sm:$0xff]
    %v328 = vld [vmem:[#allocation5 + $0x278] sm:$0xf]
    %v329 = vld [vmem:[#allocation5 + $0x27c] sm:$0xff]
    %v330 = vld [vmem:[#allocation5 + $0x284] sm:$0xf]
    %v331 = vld [vmem:[#allocation5 + $0x288] sm:$0xff]
    %v332 = vld [vmem:[#allocation5 + $0x290] sm:$0xf]
    %v333 = vld [vmem:[#allocation5 + $0x294] sm:$0xff]
    %v334 = vld [vmem:[#allocation5 + $0x29c] sm:$0xf]
    %v335 = vld [vmem:[#allocation5 + $0x2a0] sm:$0xff]
    %v336 = vld [vmem:[#allocation5 + $0x2a8] sm:$0xf]
    %v337 = vld [vmem:[#allocation5 + $0x2ac] sm:$0xff]
    %v338 = vld [vmem:[#allocation5 + $0x2b4] sm:$0xf]
    %v339 = vld [vmem:[#allocation5 + $0x2b8] sm:$0xff]
    %v340 = vld [vmem:[#allocation5 + $0x2c0] sm:$0xf]
    %v341 = vld [vmem:[#allocation5 + $0x2c4] sm:$0xff]
    %v342 = vld [vmem:[#allocation5 + $0x2cc] sm:$0xf]
    %v343 = vld [vmem:[#allocation5 + $0x2d0] sm:$0xff]
    %v344 = vld [vmem:[#allocation5 + $0x2d8] sm:$0xf]
    %v345 = vld [vmem:[#allocation5 + $0x2dc] sm:$0xff]
    %v346 = vld [vmem:[#allocation5 + $0x2e4] sm:$0xf]
    %v347 = vld [vmem:[#allocation5 + $0x2e8] sm:$0xff]
    %v348 = vld [vmem:[#allocation5 + $0x2f0] sm:$0xf]
    %v349 = vld [vmem:[#allocation5 + $0x2f4] sm:$0xff]
    %v350 = vld [vmem:[#allocation5 + $0x2fc] sm:$0xf]
    %v351 = vld [vmem:[%s4] sm:$0x7]
    %v353 = vperm.slane %v351, 0
    %v354 = vperm.slane %v351, 1
    %v355 = vperm.slane %v351, 2
    %v487 = vunpack.c.l.b16 %v223
    %v488 = vunpack.c.h.b16 %v223
    %v489 = vunpack.c.l.b16 %v224
    %v490 = vunpack.c.l.b16 %v225
    %v491 = vunpack.c.h.b16 %v225
    %v492 = vunpack.c.l.b16 %v226
    %v493 = vunpack.c.l.b16 %v227
    %v494 = vunpack.c.h.b16 %v227
    %v495 = vunpack.c.l.b16 %v228
    %v496 = vunpack.c.l.b16 %v229
    %v497 = vunpack.c.h.b16 %v229
    %v498 = vunpack.c.l.b16 %v230
    %v499 = vunpack.c.l.b16 %v231
    %v500 = vunpack.c.h.b16 %v231
    %v501 = vunpack.c.l.b16 %v232
    %v502 = vunpack.c.l.b16 %v233
    %v503 = vunpack.c.h.b16 %v233
    %v504 = vunpack.c.l.b16 %v234
    %v505 = vunpack.c.l.b16 %v235
    %v506 = vunpack.c.h.b16 %v235
    %v507 = vunpack.c.l.b16 %v236
    %v508 = vunpack.c.l.b16 %v237
    %v509 = vunpack.c.h.b16 %v237
    %v510 = vunpack.c.l.b16 %v238
    %v511 = vunpack.c.l.b16 %v239
    %v512 = vunpack.c.h.b16 %v239
    %v513 = vunpack.c.l.b16 %v240
    %v514 = vunpack.c.l.b16 %v241
    %v515 = vunpack.c.h.b16 %v241
    %v516 = vunpack.c.l.b16 %v242
    %v517 = vunpack.c.l.b16 %v243
    %v518 = vunpack.c.h.b16 %v243
    %v519 = vunpack.c.l.b16 %v244
    %v520 = vunpack.c.l.b16 %v245
    %v521 = vunpack.c.h.b16 %v245
    %v522 = vunpack.c.l.b16 %v246
    %v523 = vunpack.c.l.b16 %v247
    %v524 = vunpack.c.h.b16 %v247
    %v525 = vunpack.c.l.b16 %v248
    %v526 = vunpack.c.l.b16 %v249
    %v527 = vunpack.c.h.b16 %v249
    %v528 = vunpack.c.l.b16 %v250
    %v529 = vunpack.c.l.b16 %v251
    %v530 = vunpack.c.h.b16 %v251
    %v531 = vunpack.c.l.b16 %v252
    %v532 = vunpack.c.l.b16 %v253
    %v533 = vunpack.c.h.b16 %v253
    %v534 = vunpack.c.l.b16 %v254
    %v535 = vunpack.c.l.b16 %v255
    %v536 = vunpack.c.h.b16 %v255
    %v537 = vunpack.c.l.b16 %v256
    %v538 = vunpack.c.l.b16 %v257
    %v539 = vunpack.c.h.b16 %v257
    %v540 = vunpack.c.l.b16 %v258
    %v541 = vunpack.c.l.b16 %v259
    %v542 = vunpack.c.h.b16 %v259
    %v543 = vunpack.c.l.b16 %v260
    %v544 = vunpack.c.l.b16 %v261
    %v545 = vunpack.c.h.b16 %v261
    %v546 = vunpack.c.l.b16 %v262
    %v547 = vunpack.c.l.b16 %v263
    %v548 = vunpack.c.h.b16 %v263
    %v549 = vunpack.c.l.b16 %v264
    %v550 = vunpack.c.l.b16 %v265
    %v551 = vunpack.c.h.b16 %v265
    %v552 = vunpack.c.l.b16 %v266
    %v553 = vunpack.c.l.b16 %v267
    %v554 = vunpack.c.h.b16 %v267
    %v555 = vunpack.c.l.b16 %v268
    %v556 = vunpack.c.l.b16 %v269
    %v557 = vunpack.c.h.b16 %v269
    %v558 = vunpack.c.l.b16 %v270
    %v559 = vunpack.c.l.b16 %v271
    %v560 = vunpack.c.h.b16 %v271
    %v561 = vunpack.c.l.b16 %v272
    %v562 = vunpack.c.l.b16 %v273
    %v563 = vunpack.c.h.b16 %v273
    %v564 = vunpack.c.l.b16 %v274
    %v565 = vunpack.c.l.b16 %v275
    %v566 = vunpack.c.h.b16 %v275
    %v567 = vunpack.c.l.b16 %v276
    %v568 = vunpack.c.l.b16 %v277
    %v569 = vunpack.c.h.b16 %v277
    %v570 = vunpack.c.l.b16 %v278
    %v571 = vunpack.c.l.b16 %v279
    %v572 = vunpack.c.h.b16 %v279
    %v573 = vunpack.c.l.b16 %v280
    %v574 = vunpack.c.l.b16 %v281
    %v575 = vunpack.c.h.b16 %v281
    %v576 = vunpack.c.l.b16 %v282
    %v577 = vunpack.c.l.b16 %v283
    %v578 = vunpack.c.h.b16 %v283
    %v579 = vunpack.c.l.b16 %v284
    %v580 = vunpack.c.l.b16 %v285
    %v581 = vunpack.c.h.b16 %v285
    %v582 = vunpack.c.l.b16 %v286
    %v583 = vunpack.c.l.b16 %v287
    %v584 = vunpack.c.h.b16 %v287
    %v585 = vunpack.c.l.b16 %v288
    %v586 = vunpack.c.l.b16 %v289
    %v587 = vunpack.c.h.b16 %v289
    %v588 = vunpack.c.l.b16 %v290
    %v589 = vunpack.c.l.b16 %v291
    %v590 = vunpack.c.h.b16 %v291
    %v591 = vunpack.c.l.b16 %v292
    %v592 = vunpack.c.l.b16 %v293
    %v593 = vunpack.c.h.b16 %v293
    %v594 = vunpack.c.l.b16 %v294
    %v595 = vunpack.c.l.b16 %v295
    %v596 = vunpack.c.h.b16 %v295
    %v597 = vunpack.c.l.b16 %v296
    %v598 = vunpack.c.l.b16 %v297
    %v599 = vunpack.c.h.b16 %v297
    %v600 = vunpack.c.l.b16 %v298
    %v601 = vunpack.c.l.b16 %v299
    %v602 = vunpack.c.h.b16 %v299
    %v603 = vunpack.c.l.b16 %v300
    %v604 = vunpack.c.l.b16 %v301
    %v605 = vunpack.c.h.b16 %v301
    %v606 = vunpack.c.l.b16 %v302
    %v607 = vunpack.c.l.b16 %v303
    %v608 = vunpack.c.h.b16 %v303
    %v609 = vunpack.c.l.b16 %v304
    %v610 = vunpack.c.l.b16 %v305
    %v611 = vunpack.c.h.b16 %v305
    %v612 = vunpack.c.l.b16 %v306
    %v613 = vunpack.c.l.b16 %v307
    %v614 = vunpack.c.h.b16 %v307
    %v615 = vunpack.c.l.b16 %v308
    %v616 = vunpack.c.l.b16 %v309
    %v617 = vunpack.c.h.b16 %v309
    %v618 = vunpack.c.l.b16 %v310
    %v619 = vunpack.c.l.b16 %v311
    %v620 = vunpack.c.h.b16 %v311
    %v621 = vunpack.c.l.b16 %v312
    %v622 = vunpack.c.l.b16 %v313
    %v623 = vunpack.c.h.b16 %v313
    %v624 = vunpack.c.l.b16 %v314
    %v625 = vunpack.c.l.b16 %v315
    %v626 = vunpack.c.h.b16 %v315
    %v627 = vunpack.c.l.b16 %v316
    %v628 = vunpack.c.l.b16 %v317
    %v629 = vunpack.c.h.b16 %v317
    %v630 = vunpack.c.l.b16 %v318
    %v631 = vunpack.c.l.b16 %v319
    %v632 = vunpack.c.h.b16 %v319
    %v633 = vunpack.c.l.b16 %v320
    %v634 = vunpack.c.l.b16 %v321
    %v635 = vunpack.c.h.b16 %v321
    %v636 = vunpack.c.l.b16 %v322
    %v637 = vunpack.c.l.b16 %v323
    %v638 = vunpack.c.h.b16 %v323
    %v639 = vunpack.c.l.b16 %v324
    %v640 = vunpack.c.l.b16 %v325
    %v641 = vunpack.c.h.b16 %v325
    %v642 = vunpack.c.l.b16 %v326
    %v643 = vunpack.c.l.b16 %v327
    %v644 = vunpack.c.h.b16 %v327
    %v645 = vunpack.c.l.b16 %v328
    %v646 = vunpack.c.l.b16 %v329
    %v647 = vunpack.c.h.b16 %v329
    %v648 = vunpack.c.l.b16 %v330
    %v649 = vunpack.c.l.b16 %v331
    %v650 = vunpack.c.h.b16 %v331
    %v651 = vunpack.c.l.b16 %v332
    %v652 = vunpack.c.l.b16 %v333
    %v653 = vunpack.c.h.b16 %v333
    %v654 = vunpack.c.l.b16 %v334
    %v655 = vunpack.c.l.b16 %v335
    %v656 = vunpack.c.h.b16 %v335
    %v657 = vunpack.c.l.b16 %v336
    %v658 = vunpack.c.l.b16 %v337
    %v659 = vunpack.c.h.b16 %v337
    %v660 = vunpack.c.l.b16 %v338
    %v661 = vunpack.c.l.b16 %v339
    %v662 = vunpack.c.h.b16 %v339
    %v663 = vunpack.c.l.b16 %v340
    %v664 = vunpack.c.l.b16 %v341
    %v665 = vunpack.c.h.b16 %v341
    %v666 = vunpack.c.l.b16 %v342
    %v667 = vunpack.c.l.b16 %v343
    %v668 = vunpack.c.h.b16 %v343
    %v669 = vunpack.c.l.b16 %v344
    %v670 = vunpack.c.l.b16 %v345
    %v671 = vunpack.c.h.b16 %v345
    %v672 = vunpack.c.l.b16 %v346
    %v673 = vunpack.c.l.b16 %v347
    %v674 = vunpack.c.h.b16 %v347
    %v675 = vunpack.c.l.b16 %v348
    %v676 = vunpack.c.l.b16 %v349
    %v677 = vunpack.c.h.b16 %v349
    %v678 = vunpack.c.l.b16 %v350
    %v679 = vpack.c.b16 %v490, %v487
    %v680 = vpack.c.b16 %v491, %v488
    %v681 = vpack.c.b16 %v492, %v489
    %v682 = vpack.c.b16 %v496, %v493
    %v683 = vpack.c.b16 %v497, %v494
    %v684 = vpack.c.b16 %v498, %v495
    %v685 = vpack.c.b16 %v502, %v499
    %v686 = vpack.c.b16 %v503, %v500
    %v687 = vpack.c.b16 %v504, %v501
    %v688 = vpack.c.b16 %v508, %v505
    %v689 = vpack.c.b16 %v509, %v506
    %v690 = vpack.c.b16 %v510, %v507
    %v691 = vpack.c.b16 %v514, %v511
    %v692 = vpack.c.b16 %v515, %v512
    %v693 = vpack.c.b16 %v516, %v513
    %v694 = vpack.c.b16 %v520, %v517
    %v695 = vpack.c.b16 %v521, %v518
    %v696 = vpack.c.b16 %v522, %v519
    %v697 = vpack.c.b16 %v526, %v523
    %v698 = vpack.c.b16 %v527, %v524
    %v699 = vpack.c.b16 %v528, %v525
    %v700 = vpack.c.b16 %v532, %v529
    %v701 = vpack.c.b16 %v533, %v530
    %v702 = vpack.c.b16 %v534, %v531
    %v703 = vpack.c.b16 %v538, %v535
    %v704 = vpack.c.b16 %v539, %v536
    %v705 = vpack.c.b16 %v540, %v537
    %v706 = vpack.c.b16 %v544, %v541
    %v707 = vpack.c.b16 %v545, %v542
    %v708 = vpack.c.b16 %v546, %v543
    %v709 = vpack.c.b16 %v550, %v547
    %v710 = vpack.c.b16 %v551, %v548
    %v711 = vpack.c.b16 %v552, %v549
    %v712 = vpack.c.b16 %v556, %v553
    %v713 = vpack.c.b16 %v557, %v554
    %v714 = vpack.c.b16 %v558, %v555
    %v715 = vpack.c.b16 %v562, %v559
    %v716 = vpack.c.b16 %v563, %v560
    %v717 = vpack.c.b16 %v564, %v561
    %v718 = vpack.c.b16 %v568, %v565
    %v719 = vpack.c.b16 %v569, %v566
    %v720 = vpack.c.b16 %v570, %v567
    %v721 = vpack.c.b16 %v574, %v571
    %v722 = vpack.c.b16 %v575, %v572
    %v723 = vpack.c.b16 %v576, %v573
    %v724 = vpack.c.b16 %v580, %v577
    %v725 = vpack.c.b16 %v581, %v578
    %v726 = vpack.c.b16 %v582, %v579
    %v727 = vpack.c.b16 %v586, %v583
    %v728 = vpack.c.b16 %v587, %v584
    %v729 = vpack.c.b16 %v588, %v585
    %v730 = vpack.c.b16 %v592, %v589
    %v731 = vpack.c.b16 %v593, %v590
    %v732 = vpack.c.b16 %v594, %v591
    %v733 = vpack.c.b16 %v598, %v595
    %v734 = vpack.c.b16 %v599, %v596
    %v735 = vpack.c.b16 %v600, %v597
    %v736 = vpack.c.b16 %v604, %v601
    %v737 = vpack.c.b16 %v605, %v602
    %v738 = vpack.c.b16 %v606, %v603
    %v739 = vpack.c.b16 %v610, %v607
    %v740 = vpack.c.b16 %v611, %v608
    %v741 = vpack.c.b16 %v612, %v609
    %v742 = vpack.c.b16 %v616, %v613
    %v743 = vpack.c.b16 %v617, %v614
    %v744 = vpack.c.b16 %v618, %v615
    %v745 = vpack.c.b16 %v622, %v619
    %v746 = vpack.c.b16 %v623, %v620
    %v747 = vpack.c.b16 %v624, %v621
    %v748 = vpack.c.b16 %v628, %v625
    %v749 = vpack.c.b16 %v629, %v626
    %v750 = vpack.c.b16 %v630, %v627
    %v751 = vpack.c.b16 %v634, %v631
    %v752 = vpack.c.b16 %v635, %v632
    %v753 = vpack.c.b16 %v636, %v633
    %v754 = vpack.c.b16 %v640, %v637
    %v755 = vpack.c.b16 %v641, %v638
    %v756 = vpack.c.b16 %v642, %v639
    %v757 = vpack.c.b16 %v646, %v643
    %v758 = vpack.c.b16 %v647, %v644
    %v759 = vpack.c.b16 %v648, %v645
    %v760 = vpack.c.b16 %v652, %v649
    %v761 = vpack.c.b16 %v653, %v650
    %v762 = vpack.c.b16 %v654, %v651
    %v763 = vpack.c.b16 %v658, %v655
    %v764 = vpack.c.b16 %v659, %v656
    %v765 = vpack.c.b16 %v660, %v657
    %v766 = vpack.c.b16 %v664, %v661
    %v767 = vpack.c.b16 %v665, %v662
    %v768 = vpack.c.b16 %v666, %v663
    %v769 = vpack.c.b16 %v670, %v667
    %v770 = vpack.c.b16 %v671, %v668
    %v771 = vpack.c.b16 %v672, %v669
    %v772 = vpack.c.b16 %v676, %v673
    %v773 = vpack.c.b16 %v677, %v674
    %v774 = vpack.c.b16 %v678, %v675
    %871 = vmatpush.bf16.msra.mxu0 %v700
    %872 = vmatpush.bf16.msra.mxu0 %v697
    %873 = vmatpush.bf16.msra.mxu0 %v694
    %874 = vmatpush.bf16.msra.mxu0 %v691
    %875 = vmatpush.bf16.msra.mxu0 %v688
    %876 = vmatpush.bf16.msra.mxu0 %v685
    %877 = vmatpush.bf16.msra.mxu0 %v682
    %878 = vmatpush.bf16.msra.mxu0 %v679
    %879 = vmatmul.bf16.gmra.mxu0 %v219
    %v880 = vpop.f32.mrf.mxu0
    %v881 = vadd.f32 %v353, %v880
    %v882 = vpop.f32.mrf.mxu0
    %883 = vdwg.mxu0
    %884 = vmatpush.bf16.msra.mxu0 %v724
    %885 = vmatpush.bf16.msra.mxu0 %v721
    %886 = vmatpush.bf16.msra.mxu0 %v718
    %887 = vmatpush.bf16.msra.mxu0 %v715
    %888 = vmatpush.bf16.msra.mxu0 %v712
    %889 = vmatpush.bf16.msra.mxu0 %v709
    %890 = vmatpush.bf16.msra.mxu0 %v706
    %891 = vmatpush.bf16.msra.mxu0 %v703
    %892 = vmatmul.bf16.gmra.mxu0 %v220
    %v893 = vpop.f32.mrf.mxu0
    %v894 = vadd.f32 %v881, %v893
    %v895 = vpop.f32.mrf.mxu0
    %896 = vdwg.mxu0
    %897 = vmatpush.bf16.msra.mxu0 %v748
    %898 = vmatpush.bf16.msra.mxu0 %v745
    %899 = vmatpush.bf16.msra.mxu0 %v742
    %900 = vmatpush.bf16.msra.mxu0 %v739
    %901 = vmatpush.bf16.msra.mxu0 %v736
    %902 = vmatpush.bf16.msra.mxu0 %v733
    %903 = vmatpush.bf16.msra.mxu0 %v730
    %904 = vmatpush.bf16.msra.mxu0 %v727
    %905 = vmatmul.bf16.gmra.mxu0 %v221
    %v906 = vpop.f32.mrf.mxu0
    %v907 = vadd.f32 %v894, %v906
    %v908 = vpop.f32.mrf.mxu0
    %909 = vdwg.mxu0
    %910 = vmatpush.bf16.msra.mxu0 %v772
    %911 = vmatpush.bf16.msra.mxu0 %v769
    %912 = vmatpush.bf16.msra.mxu0 %v766
    %913 = vmatpush.bf16.msra.mxu0 %v763
    %914 = vmatpush.bf16.msra.mxu0 %v760
    %915 = vmatpush.bf16.msra.mxu0 %v757
    %916 = vmatpush.bf16.msra.mxu0 %v754
    %917 = vmatpush.bf16.msra.mxu0 %v751
    %918 = vmatmul.bf16.gmra.mxu0 %v222
    %v919 = vpop.f32.mrf.mxu0
    %v920 = vadd.f32 %v907, %v919
    %v921 = vpop.f32.mrf.mxu0
    %922 = vdwg.mxu0
    %923 = vmatpush.bf16.msra.mxu0 %v701
    %924 = vmatpush.bf16.msra.mxu0 %v698
    %925 = vmatpush.bf16.msra.mxu0 %v695
    %926 = vmatpush.bf16.msra.mxu0 %v692
    %927 = vmatpush.bf16.msra.mxu0 %v689
    %928 = vmatpush.bf16.msra.mxu0 %v686
    %929 = vmatpush.bf16.msra.mxu0 %v683
    %930 = vmatpush.bf16.msra.mxu0 %v680
    %931 = vmatmul.bf16.gmra.mxu0 %v219
    %v932 = vpop.f32.mrf.mxu0
    %v933 = vadd.f32 %v354, %v932
    %v934 = vpop.f32.mrf.mxu0
    %935 = vdwg.mxu0
    %936 = vmatpush.bf16.msra.mxu0 %v725
    %937 = vmatpush.bf16.msra.mxu0 %v722
    %938 = vmatpush.bf16.msra.mxu0 %v719
    %939 = vmatpush.bf16.msra.mxu0 %v716
    %940 = vmatpush.bf16.msra.mxu0 %v713
    %941 = vmatpush.bf16.msra.mxu0 %v710
    %942 = vmatpush.bf16.msra.mxu0 %v707
    %943 = vmatpush.bf16.msra.mxu0 %v704
    %944 = vmatmul.bf16.gmra.mxu0 %v220
    %v945 = vpop.f32.mrf.mxu0
    %v946 = vadd.f32 %v933, %v945
    %v947 = vpop.f32.mrf.mxu0
    %948 = vdwg.mxu0
    %949 = vmatpush.bf16.msra.mxu0 %v749
    %950 = vmatpush.bf16.msra.mxu0 %v746
    %951 = vmatpush.bf16.msra.mxu0 %v743
    %952 = vmatpush.bf16.msra.mxu0 %v740
    %953 = vmatpush.bf16.msra.mxu0 %v737
    %954 = vmatpush.bf16.msra.mxu0 %v734
    %955 = vmatpush.bf16.msra.mxu0 %v731
    %956 = vmatpush.bf16.msra.mxu0 %v728
    %957 = vmatmul.bf16.gmra.mxu0 %v221
    %v958 = vpop.f32.mrf.mxu0
    %v959 = vadd.f32 %v946, %v958
    %v960 = vpop.f32.mrf.mxu0
    %961 = vdwg.mxu0
    %962 = vmatpush.bf16.msra.mxu0 %v773
    %963 = vmatpush.bf16.msra.mxu0 %v770
    %964 = vmatpush.bf16.msra.mxu0 %v767
    %965 = vmatpush.bf16.msra.mxu0 %v764
    %966 = vmatpush.bf16.msra.mxu0 %v761
    %967 = vmatpush.bf16.msra.mxu0 %v758
    %968 = vmatpush.bf16.msra.mxu0 %v755
    %969 = vmatpush.bf16.msra.mxu0 %v752
    %970 = vmatmul.bf16.gmra.mxu0 %v222
    %v971 = vpop.f32.mrf.mxu0
    %v972 = vadd.f32 %v959, %v971
    %v973 = vpop.f32.mrf.mxu0
    %974 = vdwg.mxu0
    %975 = vmatpush.bf16.msra.mxu0 %v702
    %976 = vmatpush.bf16.msra.mxu0 %v699
    %977 = vmatpush.bf16.msra.mxu0 %v696
    %978 = vmatpush.bf16.msra.mxu0 %v693
    %979 = vmatpush.bf16.msra.mxu0 %v690
    %980 = vmatpush.bf16.msra.mxu0 %v687
    %981 = vmatpush.bf16.msra.mxu0 %v684
    %982 = vmatpush.bf16.msra.mxu0 %v681
    %983 = vmatmul.bf16.gmra.mxu0 %v219
    %v984 = vpop.f32.mrf.mxu0
    %v985 = vadd.f32 %v355, %v984
    %v986 = vpop.f32.mrf.mxu0
    %987 = vdwg.mxu0
    %988 = vmatpush.bf16.msra.mxu0 %v726
    %989 = vmatpush.bf16.msra.mxu0 %v723
    %990 = vmatpush.bf16.msra.mxu0 %v720
    %991 = vmatpush.bf16.msra.mxu0 %v717
    %992 = vmatpush.bf16.msra.mxu0 %v714
    %993 = vmatpush.bf16.msra.mxu0 %v711
    %994 = vmatpush.bf16.msra.mxu0 %v708
    %995 = vmatpush.bf16.msra.mxu0 %v705
    %996 = vmatmul.bf16.gmra.mxu0 %v220
    %v997 = vpop.f32.mrf.mxu0
    %v998 = vadd.f32 %v985, %v997
    %v999 = vpop.f32.mrf.mxu0
    %1000 = vdwg.mxu0
    %1001 = vmatpush.bf16.msra.mxu0 %v750
    %1002 = vmatpush.bf16.msra.mxu0 %v747
    %1003 = vmatpush.bf16.msra.mxu0 %v744
    %1004 = vmatpush.bf16.msra.mxu0 %v741
    %1005 = vmatpush.bf16.msra.mxu0 %v738
    %1006 = vmatpush.bf16.msra.mxu0 %v735
    %1007 = vmatpush.bf16.msra.mxu0 %v732
    %1008 = vmatpush.bf16.msra.mxu0 %v729
    %1009 = vmatmul.bf16.gmra.mxu0 %v221
    %v1010 = vpop.f32.mrf.mxu0
    %v1011 = vadd.f32 %v998, %v1010
    %v1012 = vpop.f32.mrf.mxu0
    %1013 = vdwg.mxu0
    %1014 = vmatpush.bf16.msra.mxu0 %v774
    %1015 = vmatpush.bf16.msra.mxu0 %v771
    %1016 = vmatpush.bf16.msra.mxu0 %v768
    %1017 = vmatpush.bf16.msra.mxu0 %v765
    %1018 = vmatpush.bf16.msra.mxu0 %v762
    %1019 = vmatpush.bf16.msra.mxu0 %v759
    %1020 = vmatpush.bf16.msra.mxu0 %v756
    %1021 = vmatpush.bf16.msra.mxu0 %v753
    %1022 = vmatmul.bf16.gmra.mxu0 %v222
    %v1023 = vpop.f32.mrf.mxu0
    %v1024 = vadd.f32 %v1011, %v1023
    %v1025 = vpop.f32.mrf.mxu0
    %1026 = vdwg.mxu0
    %v1027 = vmax.f32 %v920, 0.0
    %v1028 = vmax.f32 %v972, 0.0
    %v1029 = vmax.f32 %v1024, 0.0
    %v1030 = vld [vmem:[%s5] sm:$0x7]
    %v1032 = vperm.slane %v1030, 0
    %v1033 = vperm.slane %v1030, 1
    %v1034 = vperm.slane %v1030, 2
    %v1038 = vmul.f32 %v1027, %v1032
    %v1039 = vmul.f32 %v1028, %v1033
    %v1040 = vmul.f32 %v1029, %v1034
    %v1041 = vadd.f32 %v1038, %v1039
    %v1042 = vadd.f32 %v1041, %v1040
    %1043 = vadd.xlane.f32.xlu0 %v1042
    %v1044 = vpop.xlane.xlu0 %1043
    %v1045 = vld [vmem:[#allocation2] sm:$0x1]
    %v1047 = vperm.slane %v1045, 0
    %v1049 = vadd.f32 %v1044, %v1047
    %vm1050 = vcmask 7168
    %1051 = vst.msk [vmem:[%s7] sm:$0xff] %vm1050, %v1049
    // Predicated region
    $region38: #{critic_net_forward.1} parent=1 // pred_check
      _
    $region39: #{critic_net_forward.1} parent=1 // pred_check_branch
      %1053 = sbr.rel (0) target = $region41
    $region40: #{critic_net_forward.1} parent=1 // pred_region
      _
    $region41: #{critic_net_forward.1} parent=1 // pred_fallthru
      _
    // Predicated region
    $region42: #{critic_net_forward.1} parent=1 // pred_check
      _
    $region43: #{critic_net_forward.1} parent=1 // pred_check_branch
      %1055 = sbr.rel (0) target = $region45
    $region44: #{critic_net_forward.1} parent=1 // pred_region
      _
    $region45: #{critic_net_forward.1} parent=1 // pred_fallthru
      _
    %1056 = vsyncpa [#allocation4], 1
    %1057 = vsyncpa [#allocation6], 1

</llo_original>
